<compile_context>
chip_gen: v6e
topology: v6e:2x2x1
jax: 0.10.0
libtpu: 0.0.40
codegen_flags: <defaults>
</compile_context>

<pallas_src>
import functools
import math
from typing import List, Optional, Tuple

import jax
import jax.numpy as jnp
from jax import lax
from jax.experimental import pallas as pl
from jax.experimental.pallas import tpu as pltpu


def _normalize_indices(indices: Optional[List[int]], d: int) -> Optional[List[int]]:
    # Mirrors botorch.utils.transforms.normalize_indices
    if indices is None:
        return None
    normalized = []
    for i in indices:
        if i < 0:
            i = d + i
        if i < 0 or i >= d:
            raise ValueError(f"Index {i} out of bounds for dimension of size {d}")
        normalized.append(i)
    return normalized


def _apply_power(y: jax.Array, power: float) -> jax.Array:
    """Static-power dispatch: avoid the exp/log EUP path whenever possible."""
    p = float(power)
    if p == 1.0:
        return y
    if p == 0.5:
        return jnp.sqrt(y)
    if p == -0.5:
        return lax.rsqrt(y)
    if p.is_integer():
        # VALU multiply chains (handles negative exponents); matches torch for
        # negative bases with integer exponents.
        return lax.integer_pow(y, int(p))
    # Truly non-integer exponent: exp(p*log(y)) on the EUP (NaN for y<0, like torch).
    return jnp.power(y, jnp.asarray(p, dtype=y.dtype))


def _power_kernel(y_ref, o_ref, *, power: float, sel_cols, m: int):
    y = y_ref[...]
    # Upcast narrow floats once per tile (v5e has no native bf16 VPU/EUP ops).
    if jnp.issubdtype(y.dtype, jnp.floating) and y.dtype.itemsize < 4:
        y = y.astype(jnp.float32)

    y_pow = _apply_power(y, power)

    if sel_cols is not None:
        # Lane index within the block == lane index within the (rows, L) view
        # (blocks always start at lane 0).  m divides L, so lane % m is the
        # original output-column index.  Mask is a single (1, L) row built from
        # static constants and broadcast across sublanes by jnp.where.
        lane = lax.broadcasted_iota(jnp.int32, (1, y.shape[-1]), 1)
        col = lane % m
        mask = functools.reduce(
            jnp.logical_or, [col == jnp.int32(c) for c in sel_cols]
        )
        y_pow = jnp.where(mask, y_pow, y)

    o_ref[...] = y_pow.astype(o_ref.dtype)


# ~1 MiB per tile buffer => ~4 MiB with double-buffered in+out, well inside the
# default scoped VMEM on v5e/v6e/v7x.  Doc-measured: 512-row f32 tiles reach
# ~85% of HBM roofline for mem-bound elementwise ops.
_MAX_TILE_BYTES = 1 << 20
# Cap on the lcm(128, m) lane-dense width; beyond this fall back to the
# natural (R, m) layout (only triggers for unrealistically large odd m).
_MAX_FLAT_LANES = 8192


def _launch(Y2d: jax.Array, power: float, sel_cols, m: int) -> jax.Array:
    rows, lane_width = Y2d.shape
    row_bytes = lane_width * jnp.dtype(Y2d.dtype).itemsize

    if rows * row_bytes <= _MAX_TILE_BYTES:
        # Single block covering the full array (block dims == array dims is
        # always legal, no (8,128) divisibility needed).
        tile_rows = rows
    else:
        tile_rows = max(8, (_MAX_TILE_BYTES // row_bytes) // 8 * 8)

    grid = (pl.cdiv(rows, tile_rows),)  # last block may be partial; OOB writes dropped

    kernel = functools.partial(
        _power_kernel, power=float(power), sel_cols=sel_cols, m=m
    )
    return pl.pallas_call(
        kernel,
        out_shape=jax.ShapeDtypeStruct((rows, lane_width), Y2d.dtype),
        grid=grid,
        in_specs=[pl.BlockSpec((tile_rows, lane_width), lambda i: (i, 0))],
        out_specs=pl.BlockSpec((tile_rows, lane_width), lambda i: (i, 0)),
        compiler_params=pltpu.CompilerParams(
            dimension_semantics=("parallel",),
        ),
    )(Y2d)


def power_forward(
    Y: jax.Array,
    power: float,
    outputs: Optional[List[int]] = None,
    Yvar: Optional[jax.Array] = None,
) -> Tuple[jax.Array, Optional[jax.Array]]:
    """Pallas equivalent of Power.forward."""
    if Yvar is not None:
        raise NotImplementedError(
            "Power does not yet support transforming observation noise"
        )

    orig_shape = Y.shape
    m = orig_shape[-1]
    total = math.prod(orig_shape)
    if total == 0:
        return Y, Yvar

    idcs = _normalize_indices(outputs, d=m)

    # Short-circuits: identity power or no selected outputs -> no launch.
    if float(power) == 1.0:
        return Y, Yvar
    if idcs is not None and len(idcs) == 0:
        return Y, Yvar

    # If every output column is selected, no mask is needed.
    if idcs is None or set(idcs) == set(range(m)):
        sel_cols = None
    else:
        sel_cols = tuple(sorted(set(idcs)))

    dtype_bytes = jnp.dtype(Y.dtype).itemsize
    lcm_lanes = (128 * m) // math.gcd(128, m)

    # Natural (R, m) layout: already lane-dense when m % 128 == 0 (avoids the
    # flatten/relayout and any padding), or forced when the lcm layout would be
    # too wide to tile sensibly.
    use_natural = (m % 128 == 0 and m * 8 * dtype_bytes <= _MAX_TILE_BYTES) or (
        sel_cols is not None and lcm_lanes > _MAX_FLAT_LANES
    )

    if use_natural:
        Y2d = Y.reshape(-1, m)
        out2d = _launch(Y2d, power, sel_cols, m)
        return out2d.reshape(orig_shape), Yvar

    # Lane-dense flattened layout.
    if sel_cols is None:
        lane_width = 512  # any multiple of 128
    else:
        # L must be a multiple of 128 (full-width stores) and of m (so the
        # static column pattern tiles exactly across each L-wide row).
        lane_width = lcm_lanes

    rows = pl.cdiv(total, lane_width)
    padded = rows * lane_width
    flat = Y.reshape(-1)
    if padded != total:
        # Pad with 1.0 so any power stays finite; padding is sliced off below.
        flat = jnp.concatenate([flat, jnp.ones((padded - total,), dtype=Y.dtype)])
    Y2d = flat.reshape(rows, lane_width)

    out2d = _launch(Y2d, power, sel_cols, m)

    out = out2d.reshape(-1)
    if padded != total:
        out = out[:total]
    return out.reshape(orig_shape), Yvar


def _ref_power(Y, power, outputs):
    """Pure-JAX reference mirroring the torch module."""
    Y_tf = jnp.power(Y, power)
    idcs = _normalize_indices(outputs, d=Y.shape[-1])
    if idcs is not None:
        Y_tf = jnp.stack(
            [Y_tf[..., i] if i in idcs else Y[..., i] for i in range(Y.shape[-1])],
            axis=-1,
        )
    return Y_tf


if __name__ == "__main__":
    key = jax.random.PRNGKey(0)
    # batch_shape=2, n=8, m=4 training targets (positive; safe for any power)
    Y = jax.random.uniform(key, (2, 8, 4), dtype=jnp.float32, minval=0.1, maxval=2.0)

    # 1) Integer power with output selection.
    power = 2.0
    outputs = [0, 2]
    Y_tf, Yvar_tf = power_forward(Y, power=power, outputs=outputs)
    Y_tf = jax.block_until_ready(Y_tf)
    assert Y_tf.shape == Y.shape and Y_tf.dtype == Y.dtype and Yvar_tf is None
    assert jnp.allclose(Y_tf, _ref_power(Y, power, outputs), atol=1e-6, rtol=1e-6)

    # 2) All outputs (outputs=None), integer power, including negative bases
    #    (integer_pow path must stay finite, unlike exp/log).
    Y_neg = Y - 1.0
    Y_all, _ = power_forward(Y_neg, power=2.0, outputs=None)
    Y_all = jax.block_until_ready(Y_all)
    assert jnp.all(jnp.isfinite(Y_all))
    assert jnp.allclose(Y_all, Y_neg * Y_neg, atol=1e-6, rtol=1e-6)

    # 3) Non-integer power (exp/log path) on positive targets.
    Y_frac, _ = power_forward(Y, power=1.7, outputs=[1, 3])
    Y_frac = jax.block_until_ready(Y_frac)
    assert jnp.allclose(Y_frac, _ref_power(Y, 1.7, [1, 3]), atol=1e-5, rtol=1e-5)

    # 4) Square root power.
    Y_sqrt, _ = power_forward(Y, power=0.5, outputs=None)
    Y_sqrt = jax.block_until_ready(Y_sqrt)
    assert jnp.allclose(Y_sqrt, jnp.sqrt(Y), atol=1e-6, rtol=1e-6)

    # 5) bf16 input (kernel upcasts to f32 for the pow chain, casts back).
    Y_bf = Y.astype(jnp.bfloat16)
    Y_bf_tf, _ = power_forward(Y_bf, power=2.0, outputs=[0, 2])
    Y_bf_tf = jax.block_until_ready(Y_bf_tf)
    ref_bf = jnp.where(
        jnp.isin(jnp.arange(4), jnp.asarray([0, 2])),
        (Y_bf.astype(jnp.float32) ** 2).astype(jnp.bfloat16),
        Y_bf,
    )
    assert Y_bf_tf.dtype == jnp.bfloat16
    assert jnp.allclose(
        Y_bf_tf.astype(jnp.float32), ref_bf.astype(jnp.float32), atol=1e-2, rtol=1e-2
    )

    # 6) Short-circuit paths (no kernel launch).
    Y_id, _ = power_forward(Y, power=1.0, outputs=[0])
    assert jnp.allclose(Y_id, Y)
    Y_none, _ = power_forward(Y, power=3.0, outputs=[])
    assert jnp.allclose(Y_none, Y)

    # 7) Odd total with output selection (exercises the minimal-pad path).
    Y_odd = jax.random.uniform(
        jax.random.PRNGKey(1), (3, 7, 5), dtype=jnp.float32, minval=0.1, maxval=2.0
    )
    Y_odd_tf, _ = power_forward(Y_odd, power=3.0, outputs=[1])
    Y_odd_tf = jax.block_until_ready(Y_odd_tf)
    assert jnp.allclose(Y_odd_tf, _ref_power(Y_odd, 3.0, [1]), atol=1e-5, rtol=1e-5)

    # 8) Larger input: exercises the tiled, pipelined multi-block path with a
    #    partial final row-block and a negative output index.
    Y_big = jax.random.uniform(
        jax.random.PRNGKey(2), (8, 8192, 5), dtype=jnp.float32, minval=0.1, maxval=2.0
    )
    Y_big_tf, _ = power_forward(Y_big, power=2.0, outputs=[0, 2, -1])
    Y_big_tf = jax.block_until_ready(Y_big_tf)
    assert jnp.allclose(
        Y_big_tf, _ref_power(Y_big, 2.0, [0, 2, -1]), atol=1e-5, rtol=1e-5
    )

    print("KERNEL_OK")
</pallas_src>

<mosaic_0001>
module attributes {stable_mosaic.version = 11 : i64} {
  func.func @_power_kernel(%arg0: i32, %arg1: memref<1x128xf32, #tpu.memory_space<vmem>>, %arg2: memref<1x128xf32, #tpu.memory_space<vmem>>) attributes {dimension_semantics = [#tpu.dimension_semantics<parallel>], iteration_bounds = array<i64: 1>, scalar_prefetch = 0 : i64, scratch_operands = 0 : i64, tpu.core_type = #tpu.core_type<tc>, window_params = [{transform_indices = @transform_0, window_bounds = array<i64: 1, 128>}, {transform_indices = @transform_1, window_bounds = array<i64: 1, 128>}]} {
    %c0 = arith.constant 0 : index
    %c0_0 = arith.constant 0 : index
    %0 = vector.load %arg1[%c0, %c0_0] : memref<1x128xf32, #tpu.memory_space<vmem>>, vector<1x128xf32>
    %1 = arith.mulf %0, %0 : vector<1x128xf32>
    %2 = tpu.iota {dimensions = array<i32: 1>} : vector<1x128xi32>
    %c4_i32 = arith.constant 4 : i32
    %c0_i32 = arith.constant 0 : i32
    %3 = arith.cmpi eq, %c4_i32, %c0_i32 : i32
    %c1_i32 = arith.constant 1 : i32
    %4 = arith.select %3, %c1_i32, %c4_i32 : i32
    %5 = vector.broadcast %4 : i32 to vector<1x128xi32>
    %6 = arith.remsi %2, %5 : vector<1x128xi32>
    %c0_i32_1 = arith.constant 0 : i32
    %7 = vector.broadcast %c0_i32_1 : i32 to vector<1x128xi32>
    %8 = arith.cmpi ne, %6, %7 : vector<1x128xi32>
    %c0_i32_2 = arith.constant 0 : i32
    %9 = vector.broadcast %c0_i32_2 : i32 to vector<1x128xi32>
    %10 = arith.cmpi slt, %6, %9 : vector<1x128xi32>
    %c0_i32_3 = arith.constant 0 : i32
    %11 = arith.cmpi slt, %4, %c0_i32_3 : i32
    %12 = vector.broadcast %11 : i1 to vector<1x128xi1>
    %13 = vector.broadcast %12 : vector<1x128xi1> to vector<1x128xi1>
    %14 = arith.xori %10, %13 : vector<1x128xi1>
    %15 = arith.andi %14, %8 : vector<1x128xi1>
    %16 = vector.broadcast %4 : i32 to vector<1x128xi32>
    %17 = arith.addi %6, %16 : vector<1x128xi32>
    %18 = arith.select %15, %17, %6 : vector<1x128xi1>, vector<1x128xi32>
    %c0_i32_4 = arith.constant 0 : i32
    %19 = vector.broadcast %c0_i32_4 : i32 to vector<1x128xi32>
    %20 = arith.cmpi eq, %18, %19 : vector<1x128xi32>
    %c2_i32 = arith.constant 2 : i32
    %21 = vector.broadcast %c2_i32 : i32 to vector<1x128xi32>
    %22 = arith.cmpi eq, %18, %21 : vector<1x128xi32>
    %23 = arith.ori %20, %22 : vector<1x128xi1>
    %24 = arith.select %23, %1, %0 : vector<1x128xi1>, vector<1x128xf32>
    %c0_5 = arith.constant 0 : index
    %c0_6 = arith.constant 0 : index
    %25 = vector.load %arg2[%c0_5, %c0_6] : memref<1x128xf32, #tpu.memory_space<vmem>>, vector<1x128xf32>
    tpu.vector_store %arg2[%c0_5, %c0_6], %24 {strides = array<i32>} : memref<1x128xf32, #tpu.memory_space<vmem>>, vector<1x128xf32>,
    return
  }
  func.func @transform_0(%arg0: i32) -> (i32, i32) {
    %c0_i32 = arith.constant 0 : i32
    %c0_i32_0 = arith.constant 0 : i32
    return %arg0, %c0_i32 : i32, i32
  }
  func.func @transform_1(%arg0: i32) -> (i32, i32) {
    %c0_i32 = arith.constant 0 : i32
    %c0_i32_0 = arith.constant 0 : i32
    return %arg0, %c0_i32 : i32, i32
  }
}

</mosaic_0001>

<llo_original>
// kernel: tpu_custom_call.1
$region0: #{tpu_custom_call.1}
  #allocation0 [shape = 'u32[]', space=smem, size = 0x4, offset = 0x4, fixed_abs, tag = 'smem constant byte address 0x4 - core index']
  #allocation1 [shape = 'u32[144,128]{1,0:T(1,128)}', space=vmem, size = 0x12000, scoped, tag = 'internal scratch']
  %s0 = inlined_call_operand.hbm [shape: f32[1,128], index: 0, kind: input, shape index: {}]
  %s1 = inlined_call_operand.hbm [shape: f32[1,128], index: 1, kind: output, shape index: {}]
  %s2 = sld [smem:[#allocation0]]
  $region18: #{tpu_custom_call.1} parent=0
    _
  %s4 = ssub.s32 1, %s2
  %s5 = scalar_select 0, %s4, %s2
  $region1: #{tpu_custom_call.1} parent=0
    #allocation2 [shape = 'u8[512]{0}', space=vmem, size = 0x400, scoped, tag = 'input window, operand 0, single buffered']
    #allocation3 [shape = 's32[1]{0}', space=sflag, size = 0x4, scoped, tag = 'scoped memory for tpu_custom_call.1']
    #allocation4 [shape = 's32[1]{0}', space=sflag, size = 0x4, scoped, tag = 'scoped memory for tpu_custom_call.1']
    #allocation5 [shape = 'u8[512]{0}', space=vmem, size = 0x400, scoped, tag = 'output window, operand 0, single buffered']
    %6 = vsyncpa [#allocation3], 0
    %7 = vsyncpa [#allocation4], 0
    // Predicated region
    $region2: #{tpu_custom_call.1} parent=1 // pred_check
      _
    $region3: #{tpu_custom_call.1} parent=1 // pred_check_branch
      %9 = sbr.rel (0) target = $region5
    $region4: #{tpu_custom_call.1} parent=1 // pred_region
      %s11 = ssub.s32 16, 16
      %12 = vsyncadd [#allocation3], %s11
      %s14 = sshll.u32 [#allocation2], 4
      %s15 = int_to_ptr.vmem [resolvable:$true] %s14
      %17 = dma.hbm_to_vmem [thread:$0]  %s0, 16, %s15, [#allocation3]
    $region5: #{tpu_custom_call.1} parent=1 // pred_fallthru
      _
    // Predicated region
    $region6: #{tpu_custom_call.1} parent=1 // pred_check
      _
    $region7: #{tpu_custom_call.1} parent=1 // pred_check_branch
      %19 = sbr.rel (0) target = $region9
    $region8: #{tpu_custom_call.1} parent=1 // pred_region
      %20 = dma.done [#allocation3], 16
    $region9: #{tpu_custom_call.1} parent=1 // pred_fallthru
      _
    %v21 = vld [vmem:[#allocation2] sm:$0x1]
    %v22 = vmul.f32 %v21, %v21
    %v23 = vlaneseq
    %v24 = vand.u32 %v23, 127
    %vm25 = vcmp.lt.s32.totalorder %v24, 0
    %v26 = vsub.s32 0, %v24
    %v27 = vsel %vm25, %v26, %v24
    %v28 = vshrl.u32 %v27, 2
    %v29 = vand.u32 %v27, 3
    %v30 = vsub.s32 0, %v29
    %v31 = vsel %vm25, %v30, %v29
    %vm32 = vcmp.ne.s32.totalorder %v31, 0
    %vm33 = vcmp.lt.s32.totalorder %v31, 0
    %vm34 = vmand %vm33, %vm32
    %v35 = vadd.s32 %v31, 4
    %v36 = vsel %vm34, %v35, %v31
    %vm37 = vcmp.eq.s32.totalorder %v36, 0
    %vm38 = vcmp.eq.s32.totalorder %v36, 2
    %vm39 = vmor %vm37, %vm38
    %v40 = vsel %vm39, %v22, %v21
    %41 = vst [vmem:[#allocation5] sm:$0x1] %v40
    // Predicated region
    $region10: #{tpu_custom_call.1} parent=1 // pred_check
      _
    $region11: #{tpu_custom_call.1} parent=1 // pred_check_branch
      %43 = sbr.rel (0) target = $region13
    $region12: #{tpu_custom_call.1} parent=1 // pred_region
      %s45 = ssub.s32 16, 16
      %46 = vsyncadd [#allocation4], %s45
      %s48 = sshll.u32 [#allocation5], 4
      %s49 = int_to_ptr.vmem [resolvable:$true] %s48
      %51 = dma.vmem_to_hbm [thread:$0]  %s49, 16, %s1, [#allocation4]
    $region13: #{tpu_custom_call.1} parent=1 // pred_fallthru
      _
    // Predicated region
    $region14: #{tpu_custom_call.1} parent=1 // pred_check
      _
    $region15: #{tpu_custom_call.1} parent=1 // pred_check_branch
      %53 = sbr.rel (0) target = $region17
    $region16: #{tpu_custom_call.1} parent=1 // pred_region
      %54 = dma.done [#allocation4], 16
    $region17: #{tpu_custom_call.1} parent=1 // pred_fallthru
      _
    %55 = vsyncpa [#allocation3], 1
    %56 = vsyncpa [#allocation4], 1

</llo_original>
